<compile_context>
chip_gen: v6e
topology: v6e:2x2x1
jax: 0.10.0
libtpu: 0.0.40
codegen_flags: <defaults>
</compile_context>

<pallas_src>
import functools

import jax
import jax.numpy as jnp
from jax import lax
from jax.experimental import pallas as pl
from jax.experimental.pallas import tpu as pltpu

NEG_SLOPE = 0.01   # nn.LeakyReLU(negative_slope=0.01)
EPS = 1e-5         # nn.BatchNorm1d default eps


def _leaky(v):
    return jnp.where(v > 0, v, NEG_SLOPE * v)


def _res1d_kernel(x_ref, w1s_ref, w2s_ref, b_ref, o_ref, *,
                  c_out, seq_len, compute_dtype):
    """One lane-block of Nb whole samples laid out as (C, Nb*L)."""
    lanes = x_ref.shape[-1]

    # Position of each lane within its sample (blocks always hold whole samples).
    lane = lax.broadcasted_iota(jnp.int32, (1, lanes), 1)
    if (seq_len & (seq_len - 1)) == 0:          # power-of-two L: cheap bitwise AND
        pos = lane & (seq_len - 1)
    else:                                        # general L
        pos = lane % seq_len
    has_left = pos > 0                           # x[l-1] exists inside the sample
    has_right = pos < (seq_len - 1)              # x[l+1] exists inside the sample

    bias = b_ref[...].astype(jnp.float32)        # (3*C_out, 1) = [b1; bd; b2]
    zero = jnp.zeros((), compute_dtype)

    # ---- shifted input taps, built in vregs (no scratch, no host pad) ----
    x_c = x_ref[...]                             # (C_in, lanes), compute dtype
    xl = jnp.where(has_left, pltpu.roll(x_c, 1, axis=1), zero)
    xr = jnp.where(has_right, pltpu.roll(x_c, lanes - 1, axis=1), zero)

    # ---- conv1 (BN1 scale folded into weights) fused with 1x1 downsample ----
    # per-tap LHS is (2*C_out, C_in): top rows = s1*w1[:, :, k], bottom rows =
    # sd*wd for the center tap (zeros for edge taps).
    acc = jnp.dot(w1s_ref[0], xl, preferred_element_type=jnp.float32)
    acc += jnp.dot(w1s_ref[1], x_c, preferred_element_type=jnp.float32)
    acc += jnp.dot(w1s_ref[2], xr, preferred_element_type=jnp.float32)
    acc = acc + bias[: 2 * c_out]                # adds b1 (top) and bd (bottom)

    res = acc[c_out:]                            # downsample residual (+ bd), f32
    h_c = _leaky(acc[:c_out]).astype(compute_dtype)   # bn1 + leaky relu

    # ---- conv2 (BN2 scale folded into weights) ----
    hl = jnp.where(has_left, pltpu.roll(h_c, 1, axis=1), zero)
    hr = jnp.where(has_right, pltpu.roll(h_c, lanes - 1, axis=1), zero)
    out = jnp.dot(w2s_ref[0], hl, preferred_element_type=jnp.float32)
    out += jnp.dot(w2s_ref[1], h_c, preferred_element_type=jnp.float32)
    out += jnp.dot(w2s_ref[2], hr, preferred_element_type=jnp.float32)

    # ---- bn2 bias + residual add + final leaky relu ----
    y = out + bias[2 * c_out:] + res
    o_ref[...] = _leaky(y).astype(o_ref.dtype)


def _fold_bn(gamma, beta, mean, var):
    s = gamma * lax.rsqrt(var + EPS)
    return s, beta - mean * s


def _pick_block_lanes(n, seq_len, target):
    """Largest Nb*L that divides N*L, is a multiple of 128, and <= target."""
    best = None
    for nb in range(1, n + 1):
        if n % nb:
            continue
        lanes = nb * seq_len
        if lanes % 128 == 0 and lanes <= max(target, 128):
            best = lanes
    # Fallback: one block over the whole lane extent (block == full dim is
    # always legal).  Fine for small problems; huge N*L would want L-tiling.
    return best if best is not None else n * seq_len


def res1d_block_pallas(x, params, *, compute_dtype=jnp.float32,
                       target_block_lanes=2048):
    N, C_in, L = x.shape
    w1 = params["w1"]            # (C_out, C_in, 3)   PyTorch layout
    w2 = params["w2"]            # (C_out, C_out, 3)
    wd = params["wd"]            # (C_out, C_in, 1)
    C_out = w1.shape[0]

    # ---- fold BN running stats into conv weights (inference-mode BN) ----
    s1, b1 = _fold_bn(*params["bn1"])
    s2, b2 = _fold_bn(*params["bn2"])
    sd, bd = _fold_bn(*params["bnd"])

    w1f = w1 * s1[:, None, None]                     # (C_out, C_in, 3)
    w2f = w2 * s2[:, None, None]                     # (C_out, C_out, 3)
    wdf = wd[:, :, 0] * sd[:, None]                  # (C_out, C_in)

    zeros = jnp.zeros_like(wdf)
    w1s = jnp.stack([                                # (3, 2*C_out, C_in)
        jnp.concatenate([w1f[:, :, 0], zeros], axis=0),
        jnp.concatenate([w1f[:, :, 1], wdf], axis=0),   # residual rides tap 1
        jnp.concatenate([w1f[:, :, 2], zeros], axis=0),
    ], axis=0).astype(compute_dtype)
    w2s = jnp.moveaxis(w2f, 2, 0).astype(compute_dtype)     # (3, C_out, C_out)
    bias = jnp.concatenate([b1, bd, b2]).reshape(3 * C_out, 1).astype(jnp.float32)

    # ---- fold batch onto the lane axis (lane-dense slabs) ----
    x2d = jnp.transpose(x, (1, 0, 2)).reshape(C_in, N * L).astype(compute_dtype)
    total_lanes = N * L
    block_lanes = _pick_block_lanes(N, L, target_block_lanes)
    grid = (total_lanes // block_lanes,)

    kernel = functools.partial(_res1d_kernel, c_out=C_out, seq_len=L,
                               compute_dtype=compute_dtype)

    out2d = pl.pallas_call(
        kernel,
        out_shape=jax.ShapeDtypeStruct((C_out, total_lanes), x.dtype),
        grid_spec=pltpu.PrefetchScalarGridSpec(
            num_scalar_prefetch=0,
            grid=grid,
            in_specs=[
                pl.BlockSpec((C_in, block_lanes), lambda i: (0, i)),
                pl.BlockSpec((3, 2 * C_out, C_in), lambda i: (0, 0, 0)),
                pl.BlockSpec((3, C_out, C_out), lambda i: (0, 0, 0)),
                pl.BlockSpec((3 * C_out, 1), lambda i: (0, 0)),
            ],
            out_specs=pl.BlockSpec((C_out, block_lanes), lambda i: (0, i)),
        ),
        compiler_params=pltpu.CompilerParams(
            dimension_semantics=("parallel",)),
    )(x2d, w1s, w2s, bias)

    return out2d.reshape(C_out, N, L).transpose(1, 0, 2)


# ---------------- pure-JAX reference (for validation) ----------------
def _conv1d_ref(x, w, padding):
    return lax.conv_general_dilated(
        x, w, window_strides=(1,), padding=[(padding, padding)],
        dimension_numbers=("NCH", "OIH", "NCH"))


def res1d_block_ref(x, params):
    def bn(y, stats):
        gamma, beta, mean, var = stats
        s = gamma / jnp.sqrt(var + EPS)
        return y * s[None, :, None] + (beta - mean * s)[None, :, None]

    out = _conv1d_ref(x, params["w1"], 1)
    out = bn(out, params["bn1"])
    out = jnp.where(out > 0, out, NEG_SLOPE * out)
    out = _conv1d_ref(out, params["w2"], 1)
    out = bn(out, params["bn2"])
    res = _conv1d_ref(x, params["wd"], 0)
    res = bn(res, params["bnd"])
    y = out + res
    return jnp.where(y > 0, y, NEG_SLOPE * y)


def make_params(key, c_in, c_out):
    ks = jax.random.split(key, 12)

    def bn_stats(k0, k1, k2, k3):
        gamma = jax.random.uniform(k0, (c_out,), jnp.float32, 0.5, 1.5)
        beta = 0.1 * jax.random.normal(k1, (c_out,), jnp.float32)
        mean = 0.1 * jax.random.normal(k2, (c_out,), jnp.float32)
        var = jax.random.uniform(k3, (c_out,), jnp.float32, 0.5, 1.5)
        return (gamma, beta, mean, var)

    return {
        "w1": 0.3 * jax.random.normal(ks[0], (c_out, c_in, 3), jnp.float32),
        "w2": 0.3 * jax.random.normal(ks[1], (c_out, c_out, 3), jnp.float32),
        "wd": 0.3 * jax.random.normal(ks[2], (c_out, c_in, 1), jnp.float32),
        "bn1": bn_stats(ks[3], ks[4], ks[5], ks[6]),
        "bn2": bn_stats(ks[7], ks[8], ks[9], ks[10]),
        "bnd": bn_stats(ks[11], ks[3], ks[7], ks[0]),
    }


if __name__ == "__main__":
    key = jax.random.PRNGKey(0)
    k_x, k_p = jax.random.split(key)

    # N*L = 256 lanes -> lane-dense blocks; target 128 forces a 2-step grid so
    # the parallel axis (megacore / v7x 2-TC sharding) is actually exercised.
    N, C_IN, C_OUT, L = 16, 4, 8, 16
    x = jax.random.normal(k_x, (N, C_IN, L), jnp.float32)
    params = make_params(k_p, C_IN, C_OUT)

    y_ref = jax.block_until_ready(res1d_block_ref(x, params))

    # f32 compute path (tolerance allows for MXU default-precision matmuls).
    y = jax.block_until_ready(
        res1d_block_pallas(x, params, compute_dtype=jnp.float32,
                           target_block_lanes=128))
    assert y.shape == (N, C_OUT, L)
    assert jnp.allclose(y, y_ref, atol=2e-2, rtol=2e-2), "f32 kernel mismatch"

    # bf16-at-MXU path (v6e/v7x recommendation): f32 accumulate + f32 epilogue.
    y_bf16 = jax.block_until_ready(
        res1d_block_pallas(x, params, compute_dtype=jnp.bfloat16))
    assert y_bf16.shape == (N, C_OUT, L)
    assert jnp.allclose(y_bf16, y_ref, atol=1e-1, rtol=1e-1), "bf16 kernel mismatch"

    print("KERNEL_OK")
</pallas_src>

<mosaic_0001>
module attributes {stable_mosaic.version = 11 : i64} {
  func.func @_res1d_kernel(%arg0: i32, %arg1: memref<4x128xf32, #tpu.memory_space<vmem>>, %arg2: memref<3x16x4xf32, #tpu.memory_space<vmem>>, %arg3: memref<3x8x8xf32, #tpu.memory_space<vmem>>, %arg4: memref<24x1xf32, #tpu.memory_space<vmem>>, %arg5: memref<8x128xf32, #tpu.memory_space<vmem>>) attributes {dimension_semantics = [#tpu.dimension_semantics<parallel>], iteration_bounds = array<i64: 2>, scalar_prefetch = 0 : i64, scratch_operands = 0 : i64, tpu.core_type = #tpu.core_type<tc>, window_params = [{transform_indices = @transform_0, window_bounds = array<i64: 4, 128>}, {pipeline_mode = #tpu.pipeline_mode<synchronous>, transform_indices = @transform_1, window_bounds = array<i64: 3, 16, 4>}, {pipeline_mode = #tpu.pipeline_mode<synchronous>, transform_indices = @transform_2, window_bounds = array<i64: 3, 8, 8>}, {pipeline_mode = #tpu.pipeline_mode<synchronous>, transform_indices = @transform_3, window_bounds = array<i64: 24, 1>}, {transform_indices = @transform_4, window_bounds = array<i64: 8, 128>}]} {
    %0 = tpu.iota {dimensions = array<i32: 1>} : vector<1x128xi32>
    %c15_i32 = arith.constant 15 : i32
    %1 = vector.broadcast %c15_i32 : i32 to vector<1x128xi32>
    %2 = arith.andi %0, %1 : vector<1x128xi32>
    %c0_i32 = arith.constant 0 : i32
    %3 = vector.broadcast %c0_i32 : i32 to vector<1x128xi32>
    %4 = arith.cmpi sgt, %2, %3 : vector<1x128xi32>
    %c15_i32_0 = arith.constant 15 : i32
    %5 = vector.broadcast %c15_i32_0 : i32 to vector<1x128xi32>
    %6 = arith.cmpi slt, %2, %5 : vector<1x128xi32>
    %c0 = arith.constant 0 : index
    %c0_1 = arith.constant 0 : index
    %7 = vector.load %arg4[%c0, %c0_1] : memref<24x1xf32, #tpu.memory_space<vmem>>, vector<24x1xf32>
    %c0_2 = arith.constant 0 : index
    %c0_3 = arith.constant 0 : index
    %8 = vector.load %arg1[%c0_2, %c0_3] : memref<4x128xf32, #tpu.memory_space<vmem>>, vector<4x128xf32>
    %c1_i32 = arith.constant 1 : i32
    %9 = tpu.dynamic_rotate %8 by %c1_i32 dim 1 : vector<4x128xf32>, i32 -> vector<4x128xf32>
    %cst = arith.constant 0.000000e+00 : f32
    %10 = vector.shape_cast %4 : vector<1x128xi1> to vector<1x128xi1>
    %11 = vector.broadcast %10 : vector<1x128xi1> to vector<4x128xi1>
    %12 = vector.broadcast %cst : f32 to vector<4x128xf32>
    %13 = arith.select %11, %9, %12 : vector<4x128xi1>, vector<4x128xf32>
    %c127_i32 = arith.constant 127 : i32
    %14 = tpu.dynamic_rotate %8 by %c127_i32 dim 1 : vector<4x128xf32>, i32 -> vector<4x128xf32>
    %cst_4 = arith.constant 0.000000e+00 : f32
    %15 = vector.shape_cast %6 : vector<1x128xi1> to vector<1x128xi1>
    %16 = vector.broadcast %15 : vector<1x128xi1> to vector<4x128xi1>
    %17 = vector.broadcast %cst_4 : f32 to vector<4x128xf32>
    %18 = arith.select %16, %14, %17 : vector<4x128xi1>, vector<4x128xf32>
    %c0_5 = arith.constant 0 : index
    %c0_6 = arith.constant 0 : index
    %c0_7 = arith.constant 0 : index
    %19 = vector.load %arg2[%c0_5, %c0_6, %c0_7] : memref<3x16x4xf32, #tpu.memory_space<vmem>>, vector<1x16x4xf32>
    %20 = vector.shape_cast %19 : vector<1x16x4xf32> to vector<16x4xf32>
    %cst_8 = arith.constant dense<0.000000e+00> : vector<16x128xf32>
    %21 = tpu.matmul %20, %13, %cst_8 {dimension_numbers = #tpu.dot_dimension_numbers<[1], [0], [0], [1], [0, 0, 1, 1], [], []>} : vector<16x4xf32>, vector<4x128xf32>, vector<16x128xf32> -> vector<16x128xf32>
    %c1 = arith.constant 1 : index
    %c0_9 = arith.constant 0 : index
    %c0_10 = arith.constant 0 : index
    %22 = vector.load %arg2[%c1, %c0_9, %c0_10] : memref<3x16x4xf32, #tpu.memory_space<vmem>>, vector<1x16x4xf32>
    %23 = vector.shape_cast %22 : vector<1x16x4xf32> to vector<16x4xf32>
    %cst_11 = arith.constant dense<0.000000e+00> : vector<16x128xf32>
    %24 = tpu.matmul %23, %8, %cst_11 {dimension_numbers = #tpu.dot_dimension_numbers<[1], [0], [0], [1], [0, 0, 1, 1], [], []>} : vector<16x4xf32>, vector<4x128xf32>, vector<16x128xf32> -> vector<16x128xf32>
    %25 = arith.addf %21, %24 : vector<16x128xf32>
    %c2 = arith.constant 2 : index
    %c0_12 = arith.constant 0 : index
    %c0_13 = arith.constant 0 : index
    %26 = vector.load %arg2[%c2, %c0_12, %c0_13] : memref<3x16x4xf32, #tpu.memory_space<vmem>>, vector<1x16x4xf32>
    %27 = vector.shape_cast %26 : vector<1x16x4xf32> to vector<16x4xf32>
    %cst_14 = arith.constant dense<0.000000e+00> : vector<16x128xf32>
    %28 = tpu.matmul %27, %18, %cst_14 {dimension_numbers = #tpu.dot_dimension_numbers<[1], [0], [0], [1], [0, 0, 1, 1], [], []>} : vector<16x4xf32>, vector<4x128xf32>, vector<16x128xf32> -> vector<16x128xf32>
    %29 = arith.addf %25, %28 : vector<16x128xf32>
    %30 = vector.extract_strided_slice %7 {offsets = [0, 0], sizes = [16, 1], strides = [1, 1]} : vector<24x1xf32> to vector<16x1xf32>
    %31 = vector.broadcast %30 : vector<16x1xf32> to vector<16x128xf32>
    %32 = arith.addf %29, %31 : vector<16x128xf32>
    %33 = vector.extract_strided_slice %32 {offsets = [8, 0], sizes = [8, 128], strides = [1, 1]} : vector<16x128xf32> to vector<8x128xf32>
    %34 = vector.extract_strided_slice %32 {offsets = [0, 0], sizes = [8, 128], strides = [1, 1]} : vector<16x128xf32> to vector<8x128xf32>
    %cst_15 = arith.constant 0.000000e+00 : f32
    %35 = vector.broadcast %cst_15 : f32 to vector<8x128xf32>
    %36 = arith.cmpf ogt, %34, %35 : vector<8x128xf32>
    %cst_16 = arith.constant 0.00999999977 : f32
    %37 = vector.broadcast %cst_16 : f32 to vector<8x128xf32>
    %38 = arith.mulf %37, %34 : vector<8x128xf32>
    %39 = arith.select %36, %34, %38 : vector<8x128xi1>, vector<8x128xf32>
    %c1_i32_17 = arith.constant 1 : i32
    %40 = tpu.dynamic_rotate %39 by %c1_i32_17 dim 1 : vector<8x128xf32>, i32 -> vector<8x128xf32>
    %cst_18 = arith.constant 0.000000e+00 : f32
    %41 = vector.shape_cast %4 : vector<1x128xi1> to vector<1x128xi1>
    %42 = vector.broadcast %41 : vector<1x128xi1> to vector<8x128xi1>
    %43 = vector.broadcast %cst_18 : f32 to vector<8x128xf32>
    %44 = arith.select %42, %40, %43 : vector<8x128xi1>, vector<8x128xf32>
    %c127_i32_19 = arith.constant 127 : i32
    %45 = tpu.dynamic_rotate %39 by %c127_i32_19 dim 1 : vector<8x128xf32>, i32 -> vector<8x128xf32>
    %cst_20 = arith.constant 0.000000e+00 : f32
    %46 = vector.shape_cast %6 : vector<1x128xi1> to vector<1x128xi1>
    %47 = vector.broadcast %46 : vector<1x128xi1> to vector<8x128xi1>
    %48 = vector.broadcast %cst_20 : f32 to vector<8x128xf32>
    %49 = arith.select %47, %45, %48 : vector<8x128xi1>, vector<8x128xf32>
    %c0_21 = arith.constant 0 : index
    %c0_22 = arith.constant 0 : index
    %c0_23 = arith.constant 0 : index
    %50 = vector.load %arg3[%c0_21, %c0_22, %c0_23] : memref<3x8x8xf32, #tpu.memory_space<vmem>>, vector<1x8x8xf32>
    %51 = vector.shape_cast %50 : vector<1x8x8xf32> to vector<8x8xf32>
    %cst_24 = arith.constant dense<0.000000e+00> : vector<8x128xf32>
    %52 = tpu.matmul %51, %44, %cst_24 {dimension_numbers = #tpu.dot_dimension_numbers<[1], [0], [0], [1], [0, 0, 1, 1], [], []>} : vector<8x8xf32>, vector<8x128xf32>, vector<8x128xf32> -> vector<8x128xf32>
    %c1_25 = arith.constant 1 : index
    %c0_26 = arith.constant 0 : index
    %c0_27 = arith.constant 0 : index
    %53 = vector.load %arg3[%c1_25, %c0_26, %c0_27] : memref<3x8x8xf32, #tpu.memory_space<vmem>>, vector<1x8x8xf32>
    %54 = vector.shape_cast %53 : vector<1x8x8xf32> to vector<8x8xf32>
    %cst_28 = arith.constant dense<0.000000e+00> : vector<8x128xf32>
    %55 = tpu.matmul %54, %39, %cst_28 {dimension_numbers = #tpu.dot_dimension_numbers<[1], [0], [0], [1], [0, 0, 1, 1], [], []>} : vector<8x8xf32>, vector<8x128xf32>, vector<8x128xf32> -> vector<8x128xf32>
    %56 = arith.addf %52, %55 : vector<8x128xf32>
    %c2_29 = arith.constant 2 : index
    %c0_30 = arith.constant 0 : index
    %c0_31 = arith.constant 0 : index
    %57 = vector.load %arg3[%c2_29, %c0_30, %c0_31] : memref<3x8x8xf32, #tpu.memory_space<vmem>>, vector<1x8x8xf32>
    %58 = vector.shape_cast %57 : vector<1x8x8xf32> to vector<8x8xf32>
    %cst_32 = arith.constant dense<0.000000e+00> : vector<8x128xf32>
    %59 = tpu.matmul %58, %49, %cst_32 {dimension_numbers = #tpu.dot_dimension_numbers<[1], [0], [0], [1], [0, 0, 1, 1], [], []>} : vector<8x8xf32>, vector<8x128xf32>, vector<8x128xf32> -> vector<8x128xf32>
    %60 = arith.addf %56, %59 : vector<8x128xf32>
    %61 = vector.extract_strided_slice %7 {offsets = [16, 0], sizes = [8, 1], strides = [1, 1]} : vector<24x1xf32> to vector<8x1xf32>
    %62 = vector.broadcast %61 : vector<8x1xf32> to vector<8x128xf32>
    %63 = arith.addf %60, %62 : vector<8x128xf32>
    %64 = arith.addf %63, %33 : vector<8x128xf32>
    %cst_33 = arith.constant 0.000000e+00 : f32
    %65 = vector.broadcast %cst_33 : f32 to vector<8x128xf32>
    %66 = arith.cmpf ogt, %64, %65 : vector<8x128xf32>
    %cst_34 = arith.constant 0.00999999977 : f32
    %67 = vector.broadcast %cst_34 : f32 to vector<8x128xf32>
    %68 = arith.mulf %67, %64 : vector<8x128xf32>
    %69 = arith.select %66, %64, %68 : vector<8x128xi1>, vector<8x128xf32>
    %c0_35 = arith.constant 0 : index
    %c0_36 = arith.constant 0 : index
    %70 = vector.load %arg5[%c0_35, %c0_36] : memref<8x128xf32, #tpu.memory_space<vmem>>, vector<8x128xf32>
    tpu.vector_store %arg5[%c0_35, %c0_36], %69 {strides = array<i32>} : memref<8x128xf32, #tpu.memory_space<vmem>>, vector<8x128xf32>,
    return
  }
  func.func @transform_0(%arg0: i32) -> (i32, i32) {
    %c0_i32 = arith.constant 0 : i32
    %c0_i32_0 = arith.constant 0 : i32
    return %c0_i32, %arg0 : i32, i32
  }
  func.func @transform_1(%arg0: i32) -> (i32, i32, i32) {
    %c0_i32 = arith.constant 0 : i32
    %c0_i32_0 = arith.constant 0 : i32
    %c0_i32_1 = arith.constant 0 : i32
    %c0_i32_2 = arith.constant 0 : i32
    return %c0_i32, %c0_i32_0, %c0_i32_1 : i32, i32, i32
  }
  func.func @transform_2(%arg0: i32) -> (i32, i32, i32) {
    %c0_i32 = arith.constant 0 : i32
    %c0_i32_0 = arith.constant 0 : i32
    %c0_i32_1 = arith.constant 0 : i32
    %c0_i32_2 = arith.constant 0 : i32
    return %c0_i32, %c0_i32_0, %c0_i32_1 : i32, i32, i32
  }
  func.func @transform_3(%arg0: i32) -> (i32, i32) {
    %c0_i32 = arith.constant 0 : i32
    %c0_i32_0 = arith.constant 0 : i32
    %c0_i32_1 = arith.constant 0 : i32
    return %c0_i32, %c0_i32_0 : i32, i32
  }
  func.func @transform_4(%arg0: i32) -> (i32, i32) {
    %c0_i32 = arith.constant 0 : i32
    %c0_i32_0 = arith.constant 0 : i32
    return %c0_i32, %arg0 : i32, i32
  }
}

</mosaic_0001>

<llo_original>
// kernel: tpu_custom_call.1
$region0: #{tpu_custom_call.1}
  #allocation0 [shape = 'u32[]', space=smem, size = 0x4, offset = 0x4, fixed_abs, tag = 'smem constant byte address 0x4 - core index']
  #allocation1 [shape = 'u32[144,128]{1,0:T(1,128)}', space=vmem, size = 0x12000, scoped, tag = 'internal scratch']
  %s0 = inlined_call_operand.vmem [shape: f32[4,256], index: 0, kind: input, shape index: {}]
  %s1 = inlined_call_operand.vmem [shape: f32[3,16,4], index: 1, kind: input, shape index: {}]
  %s2 = inlined_call_operand.vmem [shape: f32[3,8,8], index: 2, kind: input, shape index: {}]
  %s3 = inlined_call_operand.vmem [shape: f32[24,1], index: 3, kind: input, shape index: {}]
  %s4 = inlined_call_operand.hbm [shape: f32[8,256], index: 4, kind: output, shape index: {}]
  %s5 = sld [smem:[#allocation0]]
  $region49: #{tpu_custom_call.1} parent=0
    _
  %s7 = ssub.s32 1, %s5
  %s8 = scalar_select 0, %s7, %s5
  $region1: #{tpu_custom_call.1} parent=0
    #allocation2 [shape = 'u8[8192]{0}', space=vmem, size = 0x2000, scoped, tag = 'output window, operand 0']
    #allocation3 [shape = 's32[2]{0}', space=sflag, size = 0x8, scoped, tag = 'scoped memory for tpu_custom_call.1']
    %9 = vsyncpa [#allocation3], 0
    %s10 = scalar_lea.sflag [#allocation3], 1
    %11 = vsyncpa %s10, 0
    loop: start=0, step=1, limit=4
    $region2: #{tpu_custom_call.1} parent=1 // loop_pre_header
      _
    $region3: #{tpu_custom_call.1} parent=1 // loop_header
      %s13 = sphi 0, %s17
      %p14 = scmp.ge.s32.totalorder %s13, 4
      %s23 = sphi 0, %s25
      %s26 = sphi 0, %s23
      %s27 = sphi 0, %s26
      %s43 = sphi 0, %s27
      %s47 = sphi 0, %s47
      %s49 = sphi 0, %s47
      %s50 = sphi 0, %s49
      %s64 = sphi 0, %s50
      %s68 = sphi 0, %s68
      %s70 = sphi 0, %s68
      %s71 = sphi 0, %s70
      %s85 = sphi 0, %s71
      %s89 = sphi 0, %s89
      %s91 = sphi 0, %s89
      %s92 = sphi 0, %s91
      %s106 = sphi 0, %s92
      %s112 = sphi 0, %s114
      %s115 = sphi 0, %s112
      %s116 = sphi 0, %s115
      %s132 = sphi 0, %s116
    $region4: #{tpu_custom_call.1} parent=1 // loop_header_branch
      %16 = sbr.rel (%p14) target = $region8
    $region5: #{tpu_custom_call.1} parent=1 // loop_body
      %s18 = ssub.s32 %s13, 1
      %s19 = ssub.s32 %s13, 2
      %s20 = sadd.s32 %s13, 1
      %s21 = ssub.s32 %s13, %s20
      %p22 = scmp.eq.s32.totalorder %s21, 0
      %s24 = sadd.s32 %s23, 1
      %s25 = scalar_select %p22, %s23, %s24
      %p28 = pneg %p22
      %p29 = scmp.eq.s32.totalorder %s13, 1
      %p30 = por %p28, %p29
      %p31 = scmp.ne.s32.totalorder %s23, %s26
      %p32 = scmp.eq.s32.totalorder %s13, 0
      %p33 = por %p31, %p32
      %p34 = scmp.ne.s32.totalorder %s23, %s26
      %p35 = scmp.eq.s32.totalorder %s18, 1
      %p36 = por %p34, %p35
      %p37 = scmp.ne.s32.totalorder %s26, %s27
      %p38 = scmp.eq.s32.totalorder %s18, 0
      %p39 = por %p37, %p38
      %p40 = scmp.ne.s32.totalorder %s26, %s27
      %p41 = scmp.eq.s32.totalorder %s19, 1
      %p42 = por %p40, %p41
      %p44 = scmp.ne.s32.totalorder %s27, %s43
      %p45 = scmp.eq.s32.totalorder %s19, 0
      %p46 = por %p44, %p45
      %s48 = sadd.s32 %s47, 1
      %p51 = scmp.eq.s32.totalorder %s13, 1
      %p52 = scmp.ne.s32.totalorder %s47, %s49
      %p53 = scmp.eq.s32.totalorder %s13, 0
      %p54 = por %p52, %p53
      %p55 = scmp.ne.s32.totalorder %s47, %s49
      %p56 = scmp.eq.s32.totalorder %s18, 1
      %p57 = por %p55, %p56
      %p58 = scmp.ne.s32.totalorder %s49, %s50
      %p59 = scmp.eq.s32.totalorder %s18, 0
      %p60 = por %p58, %p59
      %p61 = scmp.ne.s32.totalorder %s49, %s50
      %p62 = scmp.eq.s32.totalorder %s19, 1
      %p63 = por %p61, %p62
      %p65 = scmp.ne.s32.totalorder %s50, %s64
      %p66 = scmp.eq.s32.totalorder %s19, 0
      %p67 = por %p65, %p66
      %s69 = sadd.s32 %s68, 1
      %p72 = scmp.eq.s32.totalorder %s13, 1
      %p73 = scmp.ne.s32.totalorder %s68, %s70
      %p74 = scmp.eq.s32.totalorder %s13, 0
      %p75 = por %p73, %p74
      %p76 = scmp.ne.s32.totalorder %s68, %s70
      %p77 = scmp.eq.s32.totalorder %s18, 1
      %p78 = por %p76, %p77
      %p79 = scmp.ne.s32.totalorder %s70, %s71
      %p80 = scmp.eq.s32.totalorder %s18, 0
      %p81 = por %p79, %p80
      %p82 = scmp.ne.s32.totalorder %s70, %s71
      %p83 = scmp.eq.s32.totalorder %s19, 1
      %p84 = por %p82, %p83
      %p86 = scmp.ne.s32.totalorder %s71, %s85
      %p87 = scmp.eq.s32.totalorder %s19, 0
      %p88 = por %p86, %p87
      %s90 = sadd.s32 %s89, 1
      %p93 = scmp.eq.s32.totalorder %s13, 1
      %p94 = scmp.ne.s32.totalorder %s89, %s91
      %p95 = scmp.eq.s32.totalorder %s13, 0
      %p96 = por %p94, %p95
      %p97 = scmp.ne.s32.totalorder %s89, %s91
      %p98 = scmp.eq.s32.totalorder %s18, 1
      %p99 = por %p97, %p98
      %p100 = scmp.ne.s32.totalorder %s91, %s92
      %p101 = scmp.eq.s32.totalorder %s18, 0
      %p102 = por %p100, %p101
      %p103 = scmp.ne.s32.totalorder %s91, %s92
      %p104 = scmp.eq.s32.totalorder %s19, 1
      %p105 = por %p103, %p104
      %p107 = scmp.ne.s32.totalorder %s92, %s106
      %p108 = scmp.eq.s32.totalorder %s19, 0
      %p109 = por %p107, %p108
      %s110 = ssub.s32 %s13, %s20
      %p111 = scmp.eq.s32.totalorder %s110, 0
      %s113 = sadd.s32 %s112, 1
      %s114 = scalar_select %p111, %s112, %s113
      %p117 = pneg %p111
      %p118 = scmp.eq.s32.totalorder %s13, 1
      %p119 = por %p117, %p118
      %p120 = scmp.ne.s32.totalorder %s112, %s115
      %p121 = scmp.eq.s32.totalorder %s13, 0
      %p122 = por %p120, %p121
      %p123 = scmp.ne.s32.totalorder %s112, %s115
      %p124 = scmp.eq.s32.totalorder %s18, 1
      %p125 = por %p123, %p124
      %p126 = scmp.ne.s32.totalorder %s115, %s116
      %p127 = scmp.eq.s32.totalorder %s18, 0
      %p128 = por %p126, %p127
      %p129 = scmp.ne.s32.totalorder %s115, %s116
      %p130 = scmp.eq.s32.totalorder %s19, 1
      %p131 = por %p129, %p130
      %p133 = scmp.ne.s32.totalorder %s116, %s132
      %p134 = scmp.eq.s32.totalorder %s19, 0
      %p135 = por %p133, %p134
      %p136 = scmp.le.s32.totalorder 1, %s13
      %p137 = scmp.lt.s32.totalorder %s13, 3
      %p138 = pnand %p136, %p137
      %p139 = pneg %p138
      // Predicated region
      $region9: #{tpu_custom_call.1} parent=5 // pred_check
        _
      $region10: #{tpu_custom_call.1} parent=5 // pred_check_branch
        %141 = sbr.rel (%p138) target = $region12
      $region11: #{tpu_custom_call.1} parent=5 // pred_region
        %s142 = ssub.s32 %s13, 1
        // Predicated region
        $region13: #{tpu_custom_call.1} parent=11 // pred_check
          %p143 = pneg %p60
        $region14: #{tpu_custom_call.1} parent=11 // pred_check_branch
          %145 = sbr.rel (%p143) target = $region16
        $region15: #{tpu_custom_call.1} parent=11 // pred_region
          _
        $region16: #{tpu_custom_call.1} parent=11 // pred_fallthru
          _
        // Predicated region
        $region17: #{tpu_custom_call.1} parent=11 // pred_check
          %p146 = pneg %p81
        $region18: #{tpu_custom_call.1} parent=11 // pred_check_branch
          %148 = sbr.rel (%p146) target = $region20
        $region19: #{tpu_custom_call.1} parent=11 // pred_region
          _
        $region20: #{tpu_custom_call.1} parent=11 // pred_fallthru
          _
        // Predicated region
        $region21: #{tpu_custom_call.1} parent=11 // pred_check
          %p149 = pneg %p102
        $region22: #{tpu_custom_call.1} parent=11 // pred_check_branch
          %151 = sbr.rel (%p149) target = $region24
        $region23: #{tpu_custom_call.1} parent=11 // pred_region
          _
        $region24: #{tpu_custom_call.1} parent=11 // pred_fallthru
          _
      $region12: #{tpu_custom_call.1} parent=5 // pred_fallthru
        _
      %p152 = scmp.lt.s32.totalorder %s13, 2
      // Predicated region
      $region25: #{tpu_custom_call.1} parent=5 // pred_check
        %p153 = pneg %p152
      $region26: #{tpu_custom_call.1} parent=5 // pred_check_branch
        %155 = sbr.rel (%p153) target = $region28
      $region27: #{tpu_custom_call.1} parent=5 // pred_region
        // Predicated region
        $region29: #{tpu_custom_call.1} parent=27 // pred_check
          %p156 = pneg %p33
        $region30: #{tpu_custom_call.1} parent=27 // pred_check_branch
          %158 = sbr.rel (%p156) target = $region32
        $region31: #{tpu_custom_call.1} parent=27 // pred_region
          %p159 = scmp.lt.s32.totalorder %s13, 1
          %s160 = scalar_select %p159, %s13, 1
          %s161 = smul.addr %s160, 4
          %s162 = scalar_lea.vmem %s0, %s161
        $region32: #{tpu_custom_call.1} parent=27 // pred_fallthru
          _
      $region28: #{tpu_custom_call.1} parent=5 // pred_fallthru
        _
      %p163 = scmp.le.s32.totalorder 1, %s13
      %p164 = scmp.lt.s32.totalorder %s13, 3
      %p165 = pnand %p163, %p164
      %p166 = pneg %p165
      // Predicated region
      $region33: #{tpu_custom_call.1} parent=5 // pred_check
        _
      $region34: #{tpu_custom_call.1} parent=5 // pred_check_branch
        %168 = sbr.rel (%p165) target = $region36
      $region35: #{tpu_custom_call.1} parent=5 // pred_region
        %s169 = ssub.s32 %s13, 1
        %p170 = scmp.lt.s32.totalorder %s18, 1
        %s171 = scalar_select %p170, %s18, 1
        %s172 = smul.addr %s171, 4
        %s173 = scalar_lea.vmem %s0, %s172
        %p174 = pneg %p39
        %p175 = pneg %p36
        %p176 = pneg %p60
        %p177 = pneg %p57
        %p178 = pneg %p81
        %p179 = pneg %p78
        %p180 = pneg %p102
        %p181 = pneg %p99
        %p182 = pneg %p128
        %p183 = pneg %p125
        %s184 = sand.u32 %s115, 1
        %s185 = scalar_lea.sflag [#allocation3], %s184
        %s186 = sand.u32 %s115, 1
        %s187 = smul.addr %s186, 8
        %s188 = scalar_lea.vmem [#allocation2], %s187
        %p189 = scmp.lt.s32.totalorder %s18, 1
        %s190 = scalar_select %p189, %s18, 1
        %s191 = smul.addr %s190, 4
        %s192 = scalar_lea.vmem %s0, %s191
        %v193 = vlaneseq
        %v194 = vand.u32 %v193, 127
        %v195 = vand.u32 %v194, 15
        %vm196 = vcmp.gt.s32.totalorder %v195, 0
        %vm197 = vcmp.lt.s32.totalorder %v195, 15
        %v198 = vld [vmem:[%s3] sm:$0xff]
        %v199 = vld [vmem:[%s3 + $0x8] sm:$0xff]
        %v200 = vld [vmem:[%s3 + $0x10] sm:$0xff]
        %v201 = vld [vmem:[%s192] sm:$0xf]
        %202 = vrot.lane.b32.xlu0 %v201, 1
        %v203 = vpop.permute.xlu0 %202
        %v204 = vsel %vm196, 1, 0
        %vm205 = vcmp.eq.s32.totalorder %v204, 1
        %v206 = vsel %vm205, %v203, 0.0
        %207 = vrot.lane.b32.xlu0 %v201, 127
        %v208 = vpop.permute.xlu0 %207
        %v209 = vsel %vm197, 1, 0
        %vm210 = vcmp.eq.s32.totalorder %v209, 1
        %v211 = vsel %vm210, %v208, 0.0
        %v212 = vld [vmem:[%s1] sm:$0xff]
        %v213 = vld [vmem:[%s1 + $0x8] sm:$0xff]
        %s214 = scalar_lea.vmem %s1, 16
        %v215 = vld [vmem:[%s214] sm:$0xff]
        %v216 = vld [vmem:[%s214 + $0x8] sm:$0xff]
        %vm217 = vcmask 31744
        %v219 = vsel %vm217, %v215, 0
        %v222 = vsel %vm217, %v216, 0
        %vm224 = vcmask 1043456
        %v226 = vsel %vm224, %v201, 0
        %228 = vmatprep.subr.mxu0 0.0
        %229 = vmatpush1.msra.mxu0 0.0
        %230 = vmatprep.subr.mxu0 0.0
        %231 = vmatpush1.msra.mxu0 0.0
        %232 = vmatprep.subr.mxu0 0.0
        %233 = vmatpush1.msra.mxu0 0.0
        %234 = vmatprep.subr.mxu0 0.0
        %235 = vmatpush1.msra.mxu0 0.0
        %236 = vmatprep.subr.mxu0 0.0
        %237 = vmatpush1.msra.mxu0 0.0
        %238 = vmatprep.subr.mxu0 0.0
        %239 = vmatpush1.msra.mxu0 0.0
        %240 = vmatprep.subr.mxu0 0.0
        %241 = vmatpush1.msra.mxu0 0.0
        %242 = vmatprep.subr.mxu0 0.0
        %243 = vmatpush1.msra.mxu0 0.0
        %244 = vmatprep.subr.mxu0 0.0
        %245 = vmatpush1.msra.mxu0 0.0
        %246 = vmatprep.subr.mxu0 0.0
        %247 = vmatpush1.msra.mxu0 0.0
        %248 = vmatprep.subr.mxu0 0.0
        %249 = vmatpush1.msra.mxu0 0.0
        %250 = vmatprep.subr.mxu0 0.0
        %251 = vmatpush1.msra.mxu0 0.0
        %252 = vmatprep.subr.mxu0 0.0
        %253 = vmatpush1.msra.mxu0 0.0
        %254 = vmatprep.subr.mxu0 0.0
        %255 = vmatpush1.msra.mxu0 0.0
        %256 = vmatprep.subr.mxu0 0.0
        %257 = vmatpush1.msra.mxu0 0.0
        %258 = vmatprep.subr.mxu0 0.0
        %259 = vmatpush1.msra.mxu0 %v226
        %260 = vmatprep.subr.mxu0 0.0
        %261 = vmatpush2.msra.mxu0 0.0
        %262 = vmatprep.subr.mxu0 0.0
        %263 = vmatpush2.msra.mxu0 0.0
        %264 = vmatprep.subr.mxu0 0.0
        %265 = vmatpush2.msra.mxu0 0.0
        %266 = vmatprep.subr.mxu0 0.0
        %267 = vmatpush2.msra.mxu0 0.0
        %268 = vmatprep.subr.mxu0 0.0
        %269 = vmatpush2.msra.mxu0 0.0
        %270 = vmatprep.subr.mxu0 0.0
        %271 = vmatpush2.msra.mxu0 0.0
        %272 = vmatprep.subr.mxu0 0.0
        %273 = vmatpush2.msra.mxu0 0.0
        %274 = vmatprep.subr.mxu0 0.0
        %275 = vmatpush2.msra.mxu0 0.0
        %276 = vmatprep.subr.mxu0 0.0
        %277 = vmatpush2.msra.mxu0 0.0
        %278 = vmatprep.subr.mxu0 0.0
        %279 = vmatpush2.msra.mxu0 0.0
        %280 = vmatprep.subr.mxu0 0.0
        %281 = vmatpush2.msra.mxu0 0.0
        %282 = vmatprep.subr.mxu0 0.0
        %283 = vmatpush2.msra.mxu0 0.0
        %284 = vmatprep.subr.mxu0 0.0
        %285 = vmatpush2.msra.mxu0 0.0
        %286 = vmatprep.subr.mxu0 0.0
        %287 = vmatpush2.msra.mxu0 0.0
        %288 = vmatprep.subr.mxu0 0.0
        %289 = vmatpush2.msra.mxu0 0.0
        %290 = vmatprep.subr.mxu0 0.0
        %291 = vmatpush2.msra.mxu0 0.0
        %292 = vmatprep.mubr.f32.mxu0 0.0
        %293 = vmatmul.mubr.f32.gmra.mxu0 %v219
        %v294 = vpop.f32.mrf.mxu0
        %v295 = vadd.f32 0.0, %v294
        %v296 = vpop.f32.mrf.mxu0
        %297 = vmatprep.mubr.f32.mxu0 0.0
        %298 = vmatmul.mubr.f32.gmra.mxu0 %v222
        %v299 = vpop.f32.mrf.mxu0
        %v300 = vadd.f32 0.0, %v299
        %v301 = vpop.f32.mrf.mxu0
        %302 = vdwg.mxu0
        %v304 = vsel %vm217, %v212, 0
        %v307 = vsel %vm217, %v213, 0
        %v310 = vsel %vm224, %v206, 0
        %312 = vmatprep.subr.mxu0 0.0
        %313 = vmatpush1.msra.mxu0 0.0
        %314 = vmatprep.subr.mxu0 0.0
        %315 = vmatpush1.msra.mxu0 0.0
        %316 = vmatprep.subr.mxu0 0.0
        %317 = vmatpush1.msra.mxu0 0.0
        %318 = vmatprep.subr.mxu0 0.0
        %319 = vmatpush1.msra.mxu0 0.0
        %320 = vmatprep.subr.mxu0 0.0
        %321 = vmatpush1.msra.mxu0 0.0
        %322 = vmatprep.subr.mxu0 0.0
        %323 = vmatpush1.msra.mxu0 0.0
        %324 = vmatprep.subr.mxu0 0.0
        %325 = vmatpush1.msra.mxu0 0.0
        %326 = vmatprep.subr.mxu0 0.0
        %327 = vmatpush1.msra.mxu0 0.0
        %328 = vmatprep.subr.mxu0 0.0
        %329 = vmatpush1.msra.mxu0 0.0
        %330 = vmatprep.subr.mxu0 0.0
        %331 = vmatpush1.msra.mxu0 0.0
        %332 = vmatprep.subr.mxu0 0.0
        %333 = vmatpush1.msra.mxu0 0.0
        %334 = vmatprep.subr.mxu0 0.0
        %335 = vmatpush1.msra.mxu0 0.0
        %336 = vmatprep.subr.mxu0 0.0
        %337 = vmatpush1.msra.mxu0 0.0
        %338 = vmatprep.subr.mxu0 0.0
        %339 = vmatpush1.msra.mxu0 0.0
        %340 = vmatprep.subr.mxu0 0.0
        %341 = vmatpush1.msra.mxu0 0.0
        %342 = vmatprep.subr.mxu0 0.0
        %343 = vmatpush1.msra.mxu0 %v310
        %344 = vmatprep.subr.mxu0 0.0
        %345 = vmatpush2.msra.mxu0 0.0
        %346 = vmatprep.subr.mxu0 0.0
        %347 = vmatpush2.msra.mxu0 0.0
        %348 = vmatprep.subr.mxu0 0.0
        %349 = vmatpush2.msra.mxu0 0.0
        %350 = vmatprep.subr.mxu0 0.0
        %351 = vmatpush2.msra.mxu0 0.0
        %352 = vmatprep.subr.mxu0 0.0
        %353 = vmatpush2.msra.mxu0 0.0
        %354 = vmatprep.subr.mxu0 0.0
        %355 = vmatpush2.msra.mxu0 0.0
        %356 = vmatprep.subr.mxu0 0.0
        %357 = vmatpush2.msra.mxu0 0.0
        %358 = vmatprep.subr.mxu0 0.0
        %359 = vmatpush2.msra.mxu0 0.0
        %360 = vmatprep.subr.mxu0 0.0
        %361 = vmatpush2.msra.mxu0 0.0
        %362 = vmatprep.subr.mxu0 0.0
        %363 = vmatpush2.msra.mxu0 0.0
        %364 = vmatprep.subr.mxu0 0.0
        %365 = vmatpush2.msra.mxu0 0.0
        %366 = vmatprep.subr.mxu0 0.0
        %367 = vmatpush2.msra.mxu0 0.0
        %368 = vmatprep.subr.mxu0 0.0
        %369 = vmatpush2.msra.mxu0 0.0
        %370 = vmatprep.subr.mxu0 0.0
        %371 = vmatpush2.msra.mxu0 0.0
        %372 = vmatprep.subr.mxu0 0.0
        %373 = vmatpush2.msra.mxu0 0.0
        %374 = vmatprep.subr.mxu0 0.0
        %375 = vmatpush2.msra.mxu0 0.0
        %376 = vmatprep.mubr.f32.mxu0 0.0
        %377 = vmatmul.mubr.f32.gmra.mxu0 %v304
        %v378 = vpop.f32.mrf.mxu0
        %v379 = vadd.f32 %v295, %v378
        %v380 = vpop.f32.mrf.mxu0
        %381 = vmatprep.mubr.f32.mxu0 0.0
        %382 = vmatmul.mubr.f32.gmra.mxu0 %v307
        %v383 = vpop.f32.mrf.mxu0
        %v384 = vadd.f32 %v300, %v383
        %v385 = vpop.f32.mrf.mxu0
        %386 = vdwg.mxu0
        %s387 = scalar_lea.vmem %s1, 32
        %v388 = vld [vmem:[%s387] sm:$0xff]
        %v389 = vld [vmem:[%s387 + $0x8] sm:$0xff]
        %v391 = vsel %vm217, %v388, 0
        %v394 = vsel %vm217, %v389, 0
        %v397 = vsel %vm224, %v211, 0
        %399 = vmatprep.subr.mxu0 0.0
        %400 = vmatpush1.msra.mxu0 0.0
        %401 = vmatprep.subr.mxu0 0.0
        %402 = vmatpush1.msra.mxu0 0.0
        %403 = vmatprep.subr.mxu0 0.0
        %404 = vmatpush1.msra.mxu0 0.0
        %405 = vmatprep.subr.mxu0 0.0
        %406 = vmatpush1.msra.mxu0 0.0
        %407 = vmatprep.subr.mxu0 0.0
        %408 = vmatpush1.msra.mxu0 0.0
        %409 = vmatprep.subr.mxu0 0.0
        %410 = vmatpush1.msra.mxu0 0.0
        %411 = vmatprep.subr.mxu0 0.0
        %412 = vmatpush1.msra.mxu0 0.0
        %413 = vmatprep.subr.mxu0 0.0
        %414 = vmatpush1.msra.mxu0 0.0
        %415 = vmatprep.subr.mxu0 0.0
        %416 = vmatpush1.msra.mxu0 0.0
        %417 = vmatprep.subr.mxu0 0.0
        %418 = vmatpush1.msra.mxu0 0.0
        %419 = vmatprep.subr.mxu0 0.0
        %420 = vmatpush1.msra.mxu0 0.0
        %421 = vmatprep.subr.mxu0 0.0
        %422 = vmatpush1.msra.mxu0 0.0
        %423 = vmatprep.subr.mxu0 0.0
        %424 = vmatpush1.msra.mxu0 0.0
        %425 = vmatprep.subr.mxu0 0.0
        %426 = vmatpush1.msra.mxu0 0.0
        %427 = vmatprep.subr.mxu0 0.0
        %428 = vmatpush1.msra.mxu0 0.0
        %429 = vmatprep.subr.mxu0 0.0
        %430 = vmatpush1.msra.mxu0 %v397
        %431 = vmatprep.subr.mxu0 0.0
        %432 = vmatpush2.msra.mxu0 0.0
        %433 = vmatprep.subr.mxu0 0.0
        %434 = vmatpush2.msra.mxu0 0.0
        %435 = vmatprep.subr.mxu0 0.0
        %436 = vmatpush2.msra.mxu0 0.0
        %437 = vmatprep.subr.mxu0 0.0
        %438 = vmatpush2.msra.mxu0 0.0
        %439 = vmatprep.subr.mxu0 0.0
        %440 = vmatpush2.msra.mxu0 0.0
        %441 = vmatprep.subr.mxu0 0.0
        %442 = vmatpush2.msra.mxu0 0.0
        %443 = vmatprep.subr.mxu0 0.0
        %444 = vmatpush2.msra.mxu0 0.0
        %445 = vmatprep.subr.mxu0 0.0
        %446 = vmatpush2.msra.mxu0 0.0
        %447 = vmatprep.subr.mxu0 0.0
        %448 = vmatpush2.msra.mxu0 0.0
        %449 = vmatprep.subr.mxu0 0.0
        %450 = vmatpush2.msra.mxu0 0.0
        %451 = vmatprep.subr.mxu0 0.0
        %452 = vmatpush2.msra.mxu0 0.0
        %453 = vmatprep.subr.mxu0 0.0
        %454 = vmatpush2.msra.mxu0 0.0
        %455 = vmatprep.subr.mxu0 0.0
        %456 = vmatpush2.msra.mxu0 0.0
        %457 = vmatprep.subr.mxu0 0.0
        %458 = vmatpush2.msra.mxu0 0.0
        %459 = vmatprep.subr.mxu0 0.0
        %460 = vmatpush2.msra.mxu0 0.0
        %461 = vmatprep.subr.mxu0 0.0
        %462 = vmatpush2.msra.mxu0 0.0
        %463 = vmatprep.mubr.f32.mxu0 0.0
        %464 = vmatmul.mubr.f32.gmra.mxu0 %v391
        %v465 = vpop.f32.mrf.mxu0
        %v466 = vadd.f32 0.0, %v465
        %v467 = vpop.f32.mrf.mxu0
        %468 = vmatprep.mubr.f32.mxu0 0.0
        %469 = vmatmul.mubr.f32.gmra.mxu0 %v394
        %v470 = vpop.f32.mrf.mxu0
        %v471 = vadd.f32 0.0, %v470
        %v472 = vpop.f32.mrf.mxu0
        %473 = vdwg.mxu0
        %v474 = vadd.f32 %v379, %v466
        %v475 = vadd.f32 %v384, %v471
        %477 = vset.pattern.permute.xlu0 0
        %478 = vperm.xlu0 %477, %v198
        %v479 = vpop.permute.xlu0 %478
        %482 = vset.pattern.permute.xlu0 0
        %483 = vperm.xlu0 %482, %v199
        %v484 = vpop.permute.xlu0 %483
        %v486 = vadd.f32 %v474, %v479
        %v487 = vadd.f32 %v475, %v484
        %vm488 = vcmp.gt.f32.partialorder %v486, 0.0
        %v489 = vmul.f32 %v486, 0.01
        %v490 = vsel %vm488, %v486, %v489
        %491 = vrot.lane.b32.xlu0 %v490, 1
        %v492 = vpop.permute.xlu0 %491
        %v493 = vsel %vm205, %v492, 0.0
        %494 = vrot.lane.b32.xlu0 %v490, 127
        %v495 = vpop.permute.xlu0 %494
        %v496 = vsel %vm210, %v495, 0.0
        %v497 = vld [vmem:[%s2] sm:$0xff]
        %s498 = scalar_lea.vmem %s2, 8
        %v499 = vld [vmem:[%s498] sm:$0xff]
        %vm500 = vcmask 64512
        %v502 = vsel %vm500, %v499, 0
        %504 = vmatprep.subr.mxu0 0.0
        %505 = vmatpush1.msra.mxu0 0.0
        %506 = vmatprep.subr.mxu0 0.0
        %507 = vmatpush1.msra.mxu0 0.0
        %508 = vmatprep.subr.mxu0 0.0
        %509 = vmatpush1.msra.mxu0 0.0
        %510 = vmatprep.subr.mxu0 0.0
        %511 = vmatpush1.msra.mxu0 0.0
        %512 = vmatprep.subr.mxu0 0.0
        %513 = vmatpush1.msra.mxu0 0.0
        %514 = vmatprep.subr.mxu0 0.0
        %515 = vmatpush1.msra.mxu0 0.0
        %516 = vmatprep.subr.mxu0 0.0
        %517 = vmatpush1.msra.mxu0 0.0
        %518 = vmatprep.subr.mxu0 0.0
        %519 = vmatpush1.msra.mxu0 0.0
        %520 = vmatprep.subr.mxu0 0.0
        %521 = vmatpush1.msra.mxu0 0.0
        %522 = vmatprep.subr.mxu0 0.0
        %523 = vmatpush1.msra.mxu0 0.0
        %524 = vmatprep.subr.mxu0 0.0
        %525 = vmatpush1.msra.mxu0 0.0
        %526 = vmatprep.subr.mxu0 0.0
        %527 = vmatpush1.msra.mxu0 0.0
        %528 = vmatprep.subr.mxu0 0.0
        %529 = vmatpush1.msra.mxu0 0.0
        %530 = vmatprep.subr.mxu0 0.0
        %531 = vmatpush1.msra.mxu0 0.0
        %532 = vmatprep.subr.mxu0 0.0
        %533 = vmatpush1.msra.mxu0 0.0
        %534 = vmatprep.subr.mxu0 0.0
        %535 = vmatpush1.msra.mxu0 %v490
        %536 = vmatprep.subr.mxu0 0.0
        %537 = vmatpush2.msra.mxu0 0.0
        %538 = vmatprep.subr.mxu0 0.0
        %539 = vmatpush2.msra.mxu0 0.0
        %540 = vmatprep.subr.mxu0 0.0
        %541 = vmatpush2.msra.mxu0 0.0
        %542 = vmatprep.subr.mxu0 0.0
        %543 = vmatpush2.msra.mxu0 0.0
        %544 = vmatprep.subr.mxu0 0.0
        %545 = vmatpush2.msra.mxu0 0.0
        %546 = vmatprep.subr.mxu0 0.0
        %547 = vmatpush2.msra.mxu0 0.0
        %548 = vmatprep.subr.mxu0 0.0
        %549 = vmatpush2.msra.mxu0 0.0
        %550 = vmatprep.subr.mxu0 0.0
        %551 = vmatpush2.msra.mxu0 0.0
        %552 = vmatprep.subr.mxu0 0.0
        %553 = vmatpush2.msra.mxu0 0.0
        %554 = vmatprep.subr.mxu0 0.0
        %555 = vmatpush2.msra.mxu0 0.0
        %556 = vmatprep.subr.mxu0 0.0
        %557 = vmatpush2.msra.mxu0 0.0
        %558 = vmatprep.subr.mxu0 0.0
        %559 = vmatpush2.msra.mxu0 0.0
        %560 = vmatprep.subr.mxu0 0.0
        %561 = vmatpush2.msra.mxu0 0.0
        %562 = vmatprep.subr.mxu0 0.0
        %563 = vmatpush2.msra.mxu0 0.0
        %564 = vmatprep.subr.mxu0 0.0
        %565 = vmatpush2.msra.mxu0 0.0
        %566 = vmatprep.subr.mxu0 0.0
        %567 = vmatpush2.msra.mxu0 0.0
        %568 = vmatprep.mubr.f32.mxu0 0.0
        %569 = vmatmul.mubr.f32.gmra.mxu0 %v502
        %v570 = vpop.f32.mrf.mxu0
        %v571 = vadd.f32 0.0, %v570
        %v572 = vpop.f32.mrf.mxu0
        %573 = vdwg.mxu0
        %v575 = vsel %vm500, %v497, 0
        %577 = vmatprep.subr.mxu0 0.0
        %578 = vmatpush1.msra.mxu0 0.0
        %579 = vmatprep.subr.mxu0 0.0
        %580 = vmatpush1.msra.mxu0 0.0
        %581 = vmatprep.subr.mxu0 0.0
        %582 = vmatpush1.msra.mxu0 0.0
        %583 = vmatprep.subr.mxu0 0.0
        %584 = vmatpush1.msra.mxu0 0.0
        %585 = vmatprep.subr.mxu0 0.0
        %586 = vmatpush1.msra.mxu0 0.0
        %587 = vmatprep.subr.mxu0 0.0
        %588 = vmatpush1.msra.mxu0 0.0
        %589 = vmatprep.subr.mxu0 0.0
        %590 = vmatpush1.msra.mxu0 0.0
        %591 = vmatprep.subr.mxu0 0.0
        %592 = vmatpush1.msra.mxu0 0.0
        %593 = vmatprep.subr.mxu0 0.0
        %594 = vmatpush1.msra.mxu0 0.0
        %595 = vmatprep.subr.mxu0 0.0
        %596 = vmatpush1.msra.mxu0 0.0
        %597 = vmatprep.subr.mxu0 0.0
        %598 = vmatpush1.msra.mxu0 0.0
        %599 = vmatprep.subr.mxu0 0.0
        %600 = vmatpush1.msra.mxu0 0.0
        %601 = vmatprep.subr.mxu0 0.0
        %602 = vmatpush1.msra.mxu0 0.0
        %603 = vmatprep.subr.mxu0 0.0
        %604 = vmatpush1.msra.mxu0 0.0
        %605 = vmatprep.subr.mxu0 0.0
        %606 = vmatpush1.msra.mxu0 0.0
        %607 = vmatprep.subr.mxu0 0.0
        %608 = vmatpush1.msra.mxu0 %v493
        %609 = vmatprep.subr.mxu0 0.0
        %610 = vmatpush2.msra.mxu0 0.0
        %611 = vmatprep.subr.mxu0 0.0
        %612 = vmatpush2.msra.mxu0 0.0
        %613 = vmatprep.subr.mxu0 0.0
        %614 = vmatpush2.msra.mxu0 0.0
        %615 = vmatprep.subr.mxu0 0.0
        %616 = vmatpush2.msra.mxu0 0.0
        %617 = vmatprep.subr.mxu0 0.0
        %618 = vmatpush2.msra.mxu0 0.0
        %619 = vmatprep.subr.mxu0 0.0
        %620 = vmatpush2.msra.mxu0 0.0
        %621 = vmatprep.subr.mxu0 0.0
        %622 = vmatpush2.msra.mxu0 0.0
        %623 = vmatprep.subr.mxu0 0.0
        %624 = vmatpush2.msra.mxu0 0.0
        %625 = vmatprep.subr.mxu0 0.0
        %626 = vmatpush2.msra.mxu0 0.0
        %627 = vmatprep.subr.mxu0 0.0
        %628 = vmatpush2.msra.mxu0 0.0
        %629 = vmatprep.subr.mxu0 0.0
        %630 = vmatpush2.msra.mxu0 0.0
        %631 = vmatprep.subr.mxu0 0.0
        %632 = vmatpush2.msra.mxu0 0.0
        %633 = vmatprep.subr.mxu0 0.0
        %634 = vmatpush2.msra.mxu0 0.0
        %635 = vmatprep.subr.mxu0 0.0
        %636 = vmatpush2.msra.mxu0 0.0
        %637 = vmatprep.subr.mxu0 0.0
        %638 = vmatpush2.msra.mxu0 0.0
        %639 = vmatprep.subr.mxu0 0.0
        %640 = vmatpush2.msra.mxu0 0.0
        %641 = vmatprep.mubr.f32.mxu0 0.0
        %642 = vmatmul.mubr.f32.gmra.mxu0 %v575
        %v643 = vpop.f32.mrf.mxu0
        %v644 = vadd.f32 %v571, %v643
        %v645 = vpop.f32.mrf.mxu0
        %646 = vdwg.mxu0
        %s647 = scalar_lea.vmem %s2, 16
        %v648 = vld [vmem:[%s647] sm:$0xff]
        %v650 = vsel %vm500, %v648, 0
        %652 = vmatprep.subr.mxu0 0.0
        %653 = vmatpush1.msra.mxu0 0.0
        %654 = vmatprep.subr.mxu0 0.0
        %655 = vmatpush1.msra.mxu0 0.0
        %656 = vmatprep.subr.mxu0 0.0
        %657 = vmatpush1.msra.mxu0 0.0
        %658 = vmatprep.subr.mxu0 0.0
        %659 = vmatpush1.msra.mxu0 0.0
        %660 = vmatprep.subr.mxu0 0.0
        %661 = vmatpush1.msra.mxu0 0.0
        %662 = vmatprep.subr.mxu0 0.0
        %663 = vmatpush1.msra.mxu0 0.0
        %664 = vmatprep.subr.mxu0 0.0
        %665 = vmatpush1.msra.mxu0 0.0
        %666 = vmatprep.subr.mxu0 0.0
        %667 = vmatpush1.msra.mxu0 0.0
        %668 = vmatprep.subr.mxu0 0.0
        %669 = vmatpush1.msra.mxu0 0.0
        %670 = vmatprep.subr.mxu0 0.0
        %671 = vmatpush1.msra.mxu0 0.0
        %672 = vmatprep.subr.mxu0 0.0
        %673 = vmatpush1.msra.mxu0 0.0
        %674 = vmatprep.subr.mxu0 0.0
        %675 = vmatpush1.msra.mxu0 0.0
        %676 = vmatprep.subr.mxu0 0.0
        %677 = vmatpush1.msra.mxu0 0.0
        %678 = vmatprep.subr.mxu0 0.0
        %679 = vmatpush1.msra.mxu0 0.0
        %680 = vmatprep.subr.mxu0 0.0
        %681 = vmatpush1.msra.mxu0 0.0
        %682 = vmatprep.subr.mxu0 0.0
        %683 = vmatpush1.msra.mxu0 %v496
        %684 = vmatprep.subr.mxu0 0.0
        %685 = vmatpush2.msra.mxu0 0.0
        %686 = vmatprep.subr.mxu0 0.0
        %687 = vmatpush2.msra.mxu0 0.0
        %688 = vmatprep.subr.mxu0 0.0
        %689 = vmatpush2.msra.mxu0 0.0
        %690 = vmatprep.subr.mxu0 0.0
        %691 = vmatpush2.msra.mxu0 0.0
        %692 = vmatprep.subr.mxu0 0.0
        %693 = vmatpush2.msra.mxu0 0.0
        %694 = vmatprep.subr.mxu0 0.0
        %695 = vmatpush2.msra.mxu0 0.0
        %696 = vmatprep.subr.mxu0 0.0
        %697 = vmatpush2.msra.mxu0 0.0
        %698 = vmatprep.subr.mxu0 0.0
        %699 = vmatpush2.msra.mxu0 0.0
        %700 = vmatprep.subr.mxu0 0.0
        %701 = vmatpush2.msra.mxu0 0.0
        %702 = vmatprep.subr.mxu0 0.0
        %703 = vmatpush2.msra.mxu0 0.0
        %704 = vmatprep.subr.mxu0 0.0
        %705 = vmatpush2.msra.mxu0 0.0
        %706 = vmatprep.subr.mxu0 0.0
        %707 = vmatpush2.msra.mxu0 0.0
        %708 = vmatprep.subr.mxu0 0.0
        %709 = vmatpush2.msra.mxu0 0.0
        %710 = vmatprep.subr.mxu0 0.0
        %711 = vmatpush2.msra.mxu0 0.0
        %712 = vmatprep.subr.mxu0 0.0
        %713 = vmatpush2.msra.mxu0 0.0
        %714 = vmatprep.subr.mxu0 0.0
        %715 = vmatpush2.msra.mxu0 0.0
        %716 = vmatprep.mubr.f32.mxu0 0.0
        %717 = vmatmul.mubr.f32.gmra.mxu0 %v650
        %v718 = vpop.f32.mrf.mxu0
        %v719 = vadd.f32 0.0, %v718
        %v720 = vpop.f32.mrf.mxu0
        %721 = vdwg.mxu0
        %v722 = vadd.f32 %v644, %v719
        %724 = vset.pattern.permute.xlu0 0
        %725 = vperm.xlu0 %724, %v200
        %v726 = vpop.permute.xlu0 %725
        %v728 = vadd.f32 %v722, %v726
        %v729 = vadd.f32 %v728, %v487
        %vm730 = vcmp.gt.f32.partialorder %v729, 0.0
        %v731 = vmul.f32 %v729, 0.01
        %v732 = vsel %vm730, %v729, %v731
        %733 = vst [vmem:[%s188] sm:$0xff] %v732
        %s734 = sand.u32 %s115, 1
        %s735 = scalar_lea.sflag [#allocation3], %s734
        %s736 = sand.u32 %s115, 1
        %s737 = smul.addr %s736, 8
        %s738 = scalar_lea.vmem [#allocation2], %s737
        // Predicated region
        $region37: #{tpu_custom_call.1} parent=35 // pred_check
          %p739 = pneg %p125
        $region38: #{tpu_custom_call.1} parent=35 // pred_check_branch
          %741 = sbr.rel (%p739) target = $region40
        $region39: #{tpu_custom_call.1} parent=35 // pred_region
          %s743 = ssub.s32 128, 128
          %744 = vsyncadd %s735, %s743
          %s745 = smul.addr %s18, 128
          %s746 = scalar_lea.hbm %s4, %s745
          %s748 = sshll.u32 %s738, 4
          %s749 = int_to_ptr.vmem [resolvable:$true] %s748
          %751 = dma.vmem_to_hbm [thread:$0]  %s749, 128, %s746, %s735
        $region40: #{tpu_custom_call.1} parent=35 // pred_fallthru
          _
      $region36: #{tpu_custom_call.1} parent=5 // pred_fallthru
        _
      %p752 = scmp.le.s32.totalorder 2, %s13
      // Predicated region
      $region41: #{tpu_custom_call.1} parent=5 // pred_check
        %p753 = pneg %p752
      $region42: #{tpu_custom_call.1} parent=5 // pred_check_branch
        %755 = sbr.rel (%p753) target = $region44
      $region43: #{tpu_custom_call.1} parent=5 // pred_region
        %s756 = ssub.s32 %s13, 2
        // Predicated region
        $region45: #{tpu_custom_call.1} parent=43 // pred_check
          %p757 = pneg %p131
        $region46: #{tpu_custom_call.1} parent=43 // pred_check_branch
          %759 = sbr.rel (%p757) target = $region48
        $region47: #{tpu_custom_call.1} parent=43 // pred_region
          %s760 = sand.u32 %s116, 1
          %s761 = scalar_lea.sflag [#allocation3], %s760
          %s762 = sand.u32 %s116, 1
          %s763 = smul.addr %s762, 8
          %s764 = scalar_lea.vmem [#allocation2], %s763
          %765 = dma.done %s761, 128
        $region48: #{tpu_custom_call.1} parent=43 // pred_fallthru
          _
      $region44: #{tpu_custom_call.1} parent=5 // pred_fallthru
        _
    $region6: #{tpu_custom_call.1} parent=1 // loop_footer
      %s17 = sadd.s32 1, %s13
    $region7: #{tpu_custom_call.1} parent=1 // loop_footer_branch
      %12 = sbr.rel target = $region3
    $region8: #{tpu_custom_call.1} parent=1 // loop_exit
      _
    %766 = vsyncpa [#allocation3], 1
    %s767 = scalar_lea.sflag [#allocation3], 1
    %768 = vsyncpa %s767, 1

</llo_original>
